<compile_context>
chip_gen: v5e
topology: v5e:2x2
jax: 0.10.0
libtpu: 0.0.40
codegen_flags: <defaults>
</compile_context>

<pallas_src>
import functools
import numpy as np

import jax
import jax.numpy as jnp
from jax import lax
from jax.experimental import pallas as pl
from jax.experimental.pallas import tpu as pltpu

LEAKY_SLOPE = 0.01
_IM2COL_MAX_K = 160  # fold taps into contraction dim when KH*KW*Cin <= this


def _round_up(x, m):
    return (x + m - 1) // m * m


def _pick_tr(H, N):
    """Row-tile height: divisor of H giving ~8 total grid steps (N*T),
    preferring multiples of 4 so the in-kernel slab offset stays 32-aligned."""
    t_target = max(1, 8 // max(int(N), 1))
    tr_min = max(1, -(-H // t_target))
    divs = [d for d in range(1, H + 1) if H % d == 0 and d >= tr_min]
    for pref in (4, 2, 1):
        for d in divs:
            if d % pref == 0:
                return d
    return H


@functools.lru_cache(maxsize=None)
def _vmem_cap_bytes():
    # v7x has only 64 MiB VMEM -> stay <= 48 MiB there; v5e/v6e (128 MiB) higher.
    try:
        cap = int(pltpu.get_tpu_info().vmem_capacity_bytes)
        if cap >= (128 << 20):
            return 100 << 20
    except Exception:
        pass
    return 48 << 20


# ----------------------------------------------------------------------------
# Pallas conv2d kernel: "same" padding, stride 1, fused bias + activation.
# Row-tiled output, full-image bf16 input block, bf16 MXU matmuls, f32 epilogue.
# ----------------------------------------------------------------------------
@functools.lru_cache(maxsize=None)
def _make_conv(N, H, W, Cin, Cout, KH, KW, TR, Wp, Hp, act):
    T = H // TR
    extra = 1 if KW > 1 else 0
    RHX = TR + KH - 1 + extra          # halo'd rows (+1 guard row for flat strips)
    SLAB = RHX * Wp
    CT = Cout                          # single Cout tile (Cout <= 256 in SiBANET)
    assert CT <= 256
    assert (TR * Wp) % 32 == 0         # slab offset alignment (safe for bf16 packing)
    assert Hp * Wp >= (T - 1) * TR * Wp + SLAB

    def kernel(x_ref, w_ref, b_ref, o_ref):
        # x_ref : (1, Hp*Wp, Cin) bf16  full padded image, flattened (rows*Wp)
        # w_ref : (KH, KW, Cin, CT) bf16
        # b_ref : (1, CT) f32
        # o_ref : (1, TR, W, CT) bf16
        t = pl.program_id(1)
        base = pl.multiple_of(t * (TR * Wp), 32)
        slab = x_ref[0, pl.ds(base, SLAB), :]            # (SLAB, Cin) bf16
        acc = None
        for kh in range(KH):                             # static unroll (<= 7x7)
            for kw in range(KW):
                s = kh * Wp + kw                         # static contiguous strip
                strip = slab[s:s + TR * Wp, :]           # (TR*Wp, Cin) bf16
                d = jnp.dot(strip, w_ref[kh, kw],
                            preferred_element_type=jnp.float32)
                acc = d if acc is None else acc + d      # value chain, f32
        res = acc + b_ref[...]
        if act == "relu":
            res = jnp.maximum(res, 0.0)
        elif act == "leaky":
            res = jnp.where(res >= 0.0, res, LEAKY_SLOPE * res)
        # Crop the (garbage) wide columns [W, Wp); Wp % 8 == 0 -> cheap relabel.
        res = res.reshape(TR, Wp, CT)[:, :W, :]
        o_ref[0] = res.astype(o_ref.dtype)

    # VMEM budget from actual block sizes (+ temporaries and headroom).
    x_bytes = Hp * Wp * Cin * 2
    w_bytes = KH * KW * Cin * CT * 2
    o_bytes = TR * W * CT * 2
    acc_bytes = TR * Wp * CT * 4
    slab_bytes = SLAB * Cin * 2
    need = 2 * (x_bytes + w_bytes + o_bytes) + slab_bytes + 3 * acc_bytes + (6 << 20)
    vmem_limit = int(min(max(need, 32 << 20), _vmem_cap_bytes()))

    return pl.pallas_call(
        kernel,
        out_shape=jax.ShapeDtypeStruct((N, H, W, Cout), jnp.bfloat16),
        grid_spec=pltpu.PrefetchScalarGridSpec(
            num_scalar_prefetch=0,
            grid=(N, T),
            in_specs=[
                # Full padded image per batch element; index is constant across
                # the row-tile axis so the pipeline fetches it once per n.
                pl.BlockSpec((1, Hp * Wp, Cin), lambda n, t: (n, 0, 0)),
                pl.BlockSpec((KH, KW, Cin, CT), lambda n, t: (0, 0, 0, 0)),
                pl.BlockSpec((1, CT), lambda n, t: (0, 0)),
            ],
            out_specs=pl.BlockSpec((1, TR, W, CT), lambda n, t: (n, t, 0, 0)),
        ),
        compiler_params=pltpu.CompilerParams(
            dimension_semantics=("parallel", "parallel"),
            vmem_limit_bytes=vmem_limit,
        ),
    )


def conv2d(x, w, b, act="none"):
    """x: (N,H,W,Cin), w: (KH,KW,Cin,Cout) f32, b: (Cout,).  Stride 1, pad K//2.

    Activations move in bf16 end-to-end; MXU matmuls are bf16, accumulation and
    the bias/activation epilogue are f32; outputs are bf16.
    """
    N, H, W, Cin = x.shape
    KH, KW, _, Cout = w.shape
    assert KH % 2 == 1 and KW % 2 == 1
    x = x.astype(jnp.bfloat16)

    # Cout tiling fallback (never hit by SiBANET: max Cout is 256).
    if Cout > 256:
        outs = [conv2d(x, w[..., c:c + 256], b[c:c + 256], act)
                for c in range(0, Cout, 256)]
        return jnp.concatenate(outs, axis=-1)

    # Tiny contraction (Cin in {3,6}): fold taps into K via wrapper im2col (bf16)
    # and run a single well-shaped 1x1 matmul instead of 9..49 tiny-K taps.
    if KH * KW > 1 and KH * KW * Cin <= _IM2COL_MAX_K:
        ph, pw = KH // 2, KW // 2
        xp = jnp.pad(x, ((0, 0), (ph, ph), (pw, pw), (0, 0)))
        cols = [xp[:, kh:kh + H, kw:kw + W, :]
                for kh in range(KH) for kw in range(KW)]
        x_im = jnp.concatenate(cols, axis=-1)            # (N,H,W,KH*KW*Cin) bf16
        w_im = w.reshape(1, 1, KH * KW * Cin, Cout)
        return conv2d(x_im, w_im, b, act)

    # Pad tiny Cout (the 1-channel heads) up to 8 lanes; slice afterwards.
    Cout_p = Cout if Cout % 8 == 0 else _round_up(Cout, 8)
    if Cout_p != Cout:
        w = jnp.pad(w, ((0, 0), (0, 0), (0, 0), (0, Cout_p - Cout)))
        b = jnp.pad(b, (0, Cout_p - Cout))

    ph, pw = KH // 2, KW // 2
    TR = _pick_tr(H, N)

    if KH == 1 and KW == 1 and W % 8 == 0 and (TR * W) % 32 == 0:
        # 1x1 conv: no halo and no padding copy at all (free reshape only).
        Wp, Hp = W, H
        x_flat = x.reshape(N, H * W, Cin)
    else:
        Wp = _round_up(W + KW - 1, 8)
        while (TR * Wp) % 32 != 0:      # keep the in-kernel slab offset aligned
            Wp += 8
        extra = 1 if KW > 1 else 0
        Hp = H + 2 * ph + extra
        xp = jnp.pad(x, ((0, 0), (ph, ph + extra), (pw, Wp - W - pw), (0, 0)))
        x_flat = xp.reshape(N, Hp * Wp, Cin)

    fn = _make_conv(N, H, W, Cin, Cout_p, KH, KW, TR, Wp, Hp, act)
    out = fn(x_flat, w.astype(jnp.bfloat16),
             b.reshape(1, Cout_p).astype(jnp.float32))
    if Cout_p != Cout:
        out = out[..., :Cout]
    return out


# ----------------------------------------------------------------------------
# Plain-JAX glue ops (fused by XLA under the single jit).
# ----------------------------------------------------------------------------
def max_pool2(x):
    N, H, W, C = x.shape
    return x.reshape(N, H // 2, 2, W // 2, 2, C).max(axis=(2, 4))


def bilinear_resize_feat(x, size):
    N, _, _, C = x.shape
    return jax.image.resize(x, (N, size[0], size[1], C), method="bilinear")


def bilinear_resize_kernel(w, k):
    # F.upsample(weight, size=(k,k), mode='bilinear') on the spatial dims.
    return jax.image.resize(w, (k, k, w.shape[2], w.shape[3]), method="bilinear")


# ----------------------------------------------------------------------------
# Parameter construction (deterministic, synthetic — shapes match the module).
# ----------------------------------------------------------------------------
def _conv_params(key, kh, kw, cin, cout):
    kw_key, kb_key = jax.random.split(key)
    fan_in = kh * kw * cin
    w = jax.random.normal(kw_key, (kh, kw, cin, cout), jnp.float32) / np.sqrt(fan_in)
    b = jax.random.normal(kb_key, (cout,), jnp.float32) * 0.01
    return {"w": w, "b": b}


def init_params(key):
    keys = iter(jax.random.split(key, 32))

    def vgg_branch(k):
        kk = jax.random.split(k, 7)
        return {
            "1_1": _conv_params(kk[0], 3, 3, 3, 64),
            "1_2": _conv_params(kk[1], 3, 3, 64, 64),
            "2_1": _conv_params(kk[2], 3, 3, 64, 128),
            "2_2": _conv_params(kk[3], 3, 3, 128, 128),
            "3_1": _conv_params(kk[4], 3, 3, 128, 256),
            "3_2": _conv_params(kk[5], 3, 3, 256, 256),
            "3_3": _conv_params(kk[6], 3, 3, 256, 256),
        }

    return {
        "vgg_ba": vgg_branch(next(keys)),
        "vgg_rg": vgg_branch(next(keys)),
        "c1_ba": _conv_params(next(keys), 3, 3, 64, 1),
        "c2_ba": _conv_params(next(keys), 3, 3, 128, 1),
        "c3_ba": _conv_params(next(keys), 3, 3, 256, 1),
        "c4_ba": _conv_params(next(keys), 3, 3, 3, 1),
        "c1_rg": _conv_params(next(keys), 3, 3, 64, 1),
        "c2_rg": _conv_params(next(keys), 3, 3, 128, 1),
        "c3_rg": _conv_params(next(keys), 3, 3, 256, 1),
        "c4_rg": _conv_params(next(keys), 3, 3, 3, 1),  # defined but unused (as in PyTorch)
        "c_fin": [
            _conv_params(next(keys), 3, 3, 6, 64),
            _conv_params(next(keys), 3, 3, 64, 64),
            _conv_params(next(keys), 3, 3, 64, 64),
            _conv_params(next(keys), 1, 1, 64, 1),
        ],
    }


# ----------------------------------------------------------------------------
# SiBANET forward.
# ----------------------------------------------------------------------------
def vgg_forward(x, scale, p):
    """Scale-invariant VGG trunk (3 blocks).  scale != 1 bilinearly upsamples
    the 3x3 kernels to round(scale*3) (5x5 or 7x7) with padding K//2."""
    if scale == 1:
        get_w = lambda name: p[name]["w"]
    else:
        k = int(np.round(scale * 3.0))
        get_w = lambda name: bilinear_resize_kernel(p[name]["w"], k)

    x = conv2d(x, get_w("1_1"), p["1_1"]["b"], act="leaky")
    x = conv2d(x, get_w("1_2"), p["1_2"]["b"], act="leaky")
    out1 = x
    x = max_pool2(out1)
    x = conv2d(x, get_w("2_1"), p["2_1"]["b"], act="leaky")
    x = conv2d(x, get_w("2_2"), p["2_2"]["b"], act="leaky")
    out2 = x
    x = max_pool2(out2)
    x = conv2d(x, get_w("3_1"), p["3_1"]["b"], act="leaky")
    x = conv2d(x, get_w("3_2"), p["3_2"]["b"], act="leaky")
    x = conv2d(x, get_w("3_3"), p["3_3"]["b"], act="leaky")
    out3 = x
    return out1, out2, out3


def _branch(x, vgg_p, c1, c2, c3, up_size):
    o1, o2, o3 = [], [], []
    for s in (1, 1.66666666, 2.33333333):
        a, b, c = vgg_forward(x, s, vgg_p)
        o1.append(a); o2.append(b); o3.append(c)
    m1 = jnp.maximum(o1[0], jnp.maximum(o1[1], o1[2]))
    m2 = jnp.maximum(o2[0], jnp.maximum(o2[1], o2[2]))
    m3 = jnp.maximum(o3[0], jnp.maximum(o3[1], o3[2]))
    out1_em = conv2d(m1, c1["w"], c1["b"], act="relu")
    out2_em = conv2d(bilinear_resize_feat(m2, up_size), c2["w"], c2["b"], act="relu")
    out3_em = conv2d(bilinear_resize_feat(m3, up_size), c3["w"], c3["b"], act="relu")
    out_cat = jnp.concatenate([out1_em, out2_em, out3_em], axis=-1)
    return out1_em, out2_em, out3_em, out_cat


def sibanet_forward(x_nchw, params):
    x = jnp.transpose(x_nchw, (0, 2, 3, 1)).astype(jnp.float32)  # NCHW -> NHWC
    N, H, W, _ = x.shape
    assert H % 4 == 0 and W % 4 == 0, "two 2x2 max-pools need H, W divisible by 4"
    up_size = (H, W)  # TODO(synk): original module hard-codes (112, 112)

    # Boundary-aware branch
    ba1_em, ba2_em, ba3_em, cat_ba = _branch(
        x, params["vgg_ba"], params["c1_ba"], params["c2_ba"], params["c3_ba"], up_size)
    # Region branch
    rg1_em, rg2_em, rg3_em, cat_rg = _branch(
        x, params["vgg_rg"], params["c1_rg"], params["c2_rg"], params["c3_rg"], up_size)

    # NOTE: original code applies self.c4_ba to BOTH branch concats; batch the
    # two applications along N into one pallas_call and split after.
    cat_both = jnp.concatenate([cat_ba, cat_rg], axis=0)
    out_both = conv2d(cat_both, params["c4_ba"]["w"], params["c4_ba"]["b"], act="none")
    out_ba, out_rg = out_both[:N], out_both[N:]

    # Final combination block
    h = jnp.concatenate([cat_ba, cat_rg], axis=-1)
    h = conv2d(h, params["c_fin"][0]["w"], params["c_fin"][0]["b"], act="relu")
    h = conv2d(h, params["c_fin"][1]["w"], params["c_fin"][1]["b"], act="relu")
    h = conv2d(h, params["c_fin"][2]["w"], params["c_fin"][2]["b"], act="relu")
    out_fin = conv2d(h, params["c_fin"][3]["w"], params["c_fin"][3]["b"], act="none")

    sig = lambda t: jax.nn.sigmoid(t.astype(jnp.float32))
    to_nchw = lambda t: jnp.transpose(t, (0, 3, 1, 2))
    ba_all = to_nchw(sig(out_ba))
    ba1 = to_nchw(sig(ba1_em))
    ba2 = to_nchw(sig(ba2_em))
    ba3 = to_nchw(sig(ba3_em))
    rg_all = to_nchw(sig(out_rg))
    rg1 = to_nchw(sig(rg1_em))
    rg2 = to_nchw(sig(rg1_em))  # bug preserved from original (uses out1_em_rg)
    rg3 = to_nchw(sig(rg1_em))  # bug preserved from original (uses out1_em_rg)
    fin = to_nchw(sig(out_fin))
    return (ba_all, ba1, ba2, ba3, rg_all, rg1, rg2, rg3, fin)


# ----------------------------------------------------------------------------
# Reference conv for the numerical self-check.
# ----------------------------------------------------------------------------
def _conv_ref(x, w, b, act):
    out = lax.conv_general_dilated(
        x, w, window_strides=(1, 1), padding="SAME",
        dimension_numbers=("NHWC", "HWIO", "NHWC"),
        precision=lax.Precision.HIGHEST) + b
    if act == "relu":
        out = jnp.maximum(out, 0.0)
    elif act == "leaky":
        out = jnp.where(out >= 0.0, out, LEAKY_SLOPE * out)
    return out


# ----------------------------------------------------------------------------
if __name__ == "__main__":
    key = jax.random.PRNGKey(0)
    k_params, k_x = jax.random.split(key)

    # --- quick numerical self-checks of the Pallas conv kernel vs XLA ---
    kc = jax.random.split(jax.random.PRNGKey(1), 6)
    xc = jax.random.normal(kc[0], (2, 16, 16, 32), jnp.float32)
    wc = jax.random.normal(kc[1], (3, 3, 32, 32), jnp.float32) / np.sqrt(9 * 32)
    bc = jax.random.normal(kc[2], (32,), jnp.float32) * 0.1
    got = conv2d(xc, wc, bc, act="leaky").astype(jnp.float32)   # multi-tap path
    ref = _conv_ref(xc, wc, bc, act="leaky")
    err = float(jnp.max(jnp.abs(got - ref)))
    assert err < 3e-2 * (float(jnp.max(jnp.abs(ref))) + 1.0), ("conv mismatch", err)

    xc2 = jax.random.normal(kc[3], (2, 8, 8, 3), jnp.float32)
    wc2 = jax.random.normal(kc[4], (5, 5, 3, 1), jnp.float32) / np.sqrt(25 * 3)
    bc2 = jax.random.normal(kc[5], (1,), jnp.float32) * 0.1
    got2 = conv2d(xc2, wc2, bc2, act="none").astype(jnp.float32)  # im2col + Cout-pad
    ref2 = _conv_ref(xc2, wc2, bc2, act="none")
    err2 = float(jnp.max(jnp.abs(got2 - ref2)))
    assert err2 < 3e-2 * (float(jnp.max(jnp.abs(ref2))) + 1.0), ("head conv mismatch", err2)

    # --- full forward, one jit ---
    params = init_params(k_params)
    # Small stand-in for the 112x112 RGB input the module expects.
    x = jax.random.normal(k_x, (2, 3, 32, 32), jnp.float32)

    forward = jax.jit(sibanet_forward)
    outs = forward(x, params)
    outs = jax.block_until_ready(outs)

    # Basic shape sanity (all maps are (N, 1, H, W)).
    N, _, H, W = x.shape
    for o in outs:
        assert o.shape == (N, 1, H, W), o.shape
        assert bool(jnp.all(jnp.isfinite(o)))
    print("KERNEL_OK")
</pallas_src>

<mosaic_0001>
module attributes {stable_mosaic.version = 11 : i64} {
  func.func @kernel(%arg0: i32, %arg1: i32, %arg2: memref<1x456x32xbf16, #tpu.memory_space<vmem>>, %arg3: memref<3x3x32x32xbf16, #tpu.memory_space<vmem>>, %arg4: memref<1x32xf32, #tpu.memory_space<vmem>>, %arg5: memref<1x4x16x32xbf16, #tpu.memory_space<vmem>>) attributes {dimension_semantics = [#tpu.dimension_semantics<parallel>, #tpu.dimension_semantics<parallel>], iteration_bounds = array<i64: 2, 4>, scalar_prefetch = 0 : i64, scratch_operands = 0 : i64, tpu.core_type = #tpu.core_type<tc>, window_params = [{transform_indices = @transform_0, window_bounds = array<i64: 1, 456, 32>}, {pipeline_mode = #tpu.pipeline_mode<synchronous>, transform_indices = @transform_1, window_bounds = array<i64: 3, 3, 32, 32>}, {pipeline_mode = #tpu.pipeline_mode<synchronous>, transform_indices = @transform_2, window_bounds = array<i64: 1, 32>}, {transform_indices = @transform_3, window_bounds = array<i64: 1, 4, 16, 32>}]} {
    %c96_i32 = arith.constant 96 : i32
    %0 = arith.muli %arg1, %c96_i32 : i32
    %1 = tpu.assume_multiple %0, 32 : i32
    %c0 = arith.constant 0 : index
    %2 = arith.index_cast %1 : i32 to index
    %c0_0 = arith.constant 0 : index
    %3 = vector.load %arg2[%c0, %2, %c0_0] : memref<1x456x32xbf16, #tpu.memory_space<vmem>>, vector<1x168x32xbf16>
    %4 = vector.shape_cast %3 : vector<1x168x32xbf16> to vector<168x32xbf16>
    %5 = vector.extract_strided_slice %4 {offsets = [0, 0], sizes = [96, 32], strides = [1, 1]} : vector<168x32xbf16> to vector<96x32xbf16>
    %c0_1 = arith.constant 0 : index
    %c0_2 = arith.constant 0 : index
    %c0_3 = arith.constant 0 : index
    %c0_4 = arith.constant 0 : index
    %6 = vector.load %arg3[%c0_1, %c0_2, %c0_3, %c0_4] : memref<3x3x32x32xbf16, #tpu.memory_space<vmem>>, vector<1x1x32x32xbf16>
    %7 = vector.shape_cast %6 : vector<1x1x32x32xbf16> to vector<32x32xbf16>
    %cst = arith.constant dense<0.000000e+00> : vector<96x32xf32>
    %8 = tpu.matmul %5, %7, %cst {dimension_numbers = #tpu.dot_dimension_numbers<[1], [0], [0], [1], [0, 0, 1, 1], [], []>} : vector<96x32xbf16>, vector<32x32xbf16>, vector<96x32xf32> -> vector<96x32xf32>
    %9 = vector.extract_strided_slice %4 {offsets = [1, 0], sizes = [96, 32], strides = [1, 1]} : vector<168x32xbf16> to vector<96x32xbf16>
    %c0_5 = arith.constant 0 : index
    %c1 = arith.constant 1 : index
    %c0_6 = arith.constant 0 : index
    %c0_7 = arith.constant 0 : index
    %10 = vector.load %arg3[%c0_5, %c1, %c0_6, %c0_7] : memref<3x3x32x32xbf16, #tpu.memory_space<vmem>>, vector<1x1x32x32xbf16>
    %11 = vector.shape_cast %10 : vector<1x1x32x32xbf16> to vector<32x32xbf16>
    %cst_8 = arith.constant dense<0.000000e+00> : vector<96x32xf32>
    %12 = tpu.matmul %9, %11, %cst_8 {dimension_numbers = #tpu.dot_dimension_numbers<[1], [0], [0], [1], [0, 0, 1, 1], [], []>} : vector<96x32xbf16>, vector<32x32xbf16>, vector<96x32xf32> -> vector<96x32xf32>
    %13 = arith.addf %8, %12 : vector<96x32xf32>
    %14 = vector.extract_strided_slice %4 {offsets = [2, 0], sizes = [96, 32], strides = [1, 1]} : vector<168x32xbf16> to vector<96x32xbf16>
    %c0_9 = arith.constant 0 : index
    %c2 = arith.constant 2 : index
    %c0_10 = arith.constant 0 : index
    %c0_11 = arith.constant 0 : index
    %15 = vector.load %arg3[%c0_9, %c2, %c0_10, %c0_11] : memref<3x3x32x32xbf16, #tpu.memory_space<vmem>>, vector<1x1x32x32xbf16>
    %16 = vector.shape_cast %15 : vector<1x1x32x32xbf16> to vector<32x32xbf16>
    %cst_12 = arith.constant dense<0.000000e+00> : vector<96x32xf32>
    %17 = tpu.matmul %14, %16, %cst_12 {dimension_numbers = #tpu.dot_dimension_numbers<[1], [0], [0], [1], [0, 0, 1, 1], [], []>} : vector<96x32xbf16>, vector<32x32xbf16>, vector<96x32xf32> -> vector<96x32xf32>
    %18 = arith.addf %13, %17 : vector<96x32xf32>
    %19 = vector.extract_strided_slice %4 {offsets = [24, 0], sizes = [96, 32], strides = [1, 1]} : vector<168x32xbf16> to vector<96x32xbf16>
    %c1_13 = arith.constant 1 : index
    %c0_14 = arith.constant 0 : index
    %c0_15 = arith.constant 0 : index
    %c0_16 = arith.constant 0 : index
    %20 = vector.load %arg3[%c1_13, %c0_14, %c0_15, %c0_16] : memref<3x3x32x32xbf16, #tpu.memory_space<vmem>>, vector<1x1x32x32xbf16>
    %21 = vector.shape_cast %20 : vector<1x1x32x32xbf16> to vector<32x32xbf16>
    %cst_17 = arith.constant dense<0.000000e+00> : vector<96x32xf32>
    %22 = tpu.matmul %19, %21, %cst_17 {dimension_numbers = #tpu.dot_dimension_numbers<[1], [0], [0], [1], [0, 0, 1, 1], [], []>} : vector<96x32xbf16>, vector<32x32xbf16>, vector<96x32xf32> -> vector<96x32xf32>
    %23 = arith.addf %18, %22 : vector<96x32xf32>
    %24 = vector.extract_strided_slice %4 {offsets = [25, 0], sizes = [96, 32], strides = [1, 1]} : vector<168x32xbf16> to vector<96x32xbf16>
    %c1_18 = arith.constant 1 : index
    %c1_19 = arith.constant 1 : index
    %c0_20 = arith.constant 0 : index
    %c0_21 = arith.constant 0 : index
    %25 = vector.load %arg3[%c1_18, %c1_19, %c0_20, %c0_21] : memref<3x3x32x32xbf16, #tpu.memory_space<vmem>>, vector<1x1x32x32xbf16>
    %26 = vector.shape_cast %25 : vector<1x1x32x32xbf16> to vector<32x32xbf16>
    %cst_22 = arith.constant dense<0.000000e+00> : vector<96x32xf32>
    %27 = tpu.matmul %24, %26, %cst_22 {dimension_numbers = #tpu.dot_dimension_numbers<[1], [0], [0], [1], [0, 0, 1, 1], [], []>} : vector<96x32xbf16>, vector<32x32xbf16>, vector<96x32xf32> -> vector<96x32xf32>
    %28 = arith.addf %23, %27 : vector<96x32xf32>
    %29 = vector.extract_strided_slice %4 {offsets = [26, 0], sizes = [96, 32], strides = [1, 1]} : vector<168x32xbf16> to vector<96x32xbf16>
    %c1_23 = arith.constant 1 : index
    %c2_24 = arith.constant 2 : index
    %c0_25 = arith.constant 0 : index
    %c0_26 = arith.constant 0 : index
    %30 = vector.load %arg3[%c1_23, %c2_24, %c0_25, %c0_26] : memref<3x3x32x32xbf16, #tpu.memory_space<vmem>>, vector<1x1x32x32xbf16>
    %31 = vector.shape_cast %30 : vector<1x1x32x32xbf16> to vector<32x32xbf16>
    %cst_27 = arith.constant dense<0.000000e+00> : vector<96x32xf32>
    %32 = tpu.matmul %29, %31, %cst_27 {dimension_numbers = #tpu.dot_dimension_numbers<[1], [0], [0], [1], [0, 0, 1, 1], [], []>} : vector<96x32xbf16>, vector<32x32xbf16>, vector<96x32xf32> -> vector<96x32xf32>
    %33 = arith.addf %28, %32 : vector<96x32xf32>
    %34 = vector.extract_strided_slice %4 {offsets = [48, 0], sizes = [96, 32], strides = [1, 1]} : vector<168x32xbf16> to vector<96x32xbf16>
    %c2_28 = arith.constant 2 : index
    %c0_29 = arith.constant 0 : index
    %c0_30 = arith.constant 0 : index
    %c0_31 = arith.constant 0 : index
    %35 = vector.load %arg3[%c2_28, %c0_29, %c0_30, %c0_31] : memref<3x3x32x32xbf16, #tpu.memory_space<vmem>>, vector<1x1x32x32xbf16>
    %36 = vector.shape_cast %35 : vector<1x1x32x32xbf16> to vector<32x32xbf16>
    %cst_32 = arith.constant dense<0.000000e+00> : vector<96x32xf32>
    %37 = tpu.matmul %34, %36, %cst_32 {dimension_numbers = #tpu.dot_dimension_numbers<[1], [0], [0], [1], [0, 0, 1, 1], [], []>} : vector<96x32xbf16>, vector<32x32xbf16>, vector<96x32xf32> -> vector<96x32xf32>
    %38 = arith.addf %33, %37 : vector<96x32xf32>
    %39 = vector.extract_strided_slice %4 {offsets = [49, 0], sizes = [96, 32], strides = [1, 1]} : vector<168x32xbf16> to vector<96x32xbf16>
    %c2_33 = arith.constant 2 : index
    %c1_34 = arith.constant 1 : index
    %c0_35 = arith.constant 0 : index
    %c0_36 = arith.constant 0 : index
    %40 = vector.load %arg3[%c2_33, %c1_34, %c0_35, %c0_36] : memref<3x3x32x32xbf16, #tpu.memory_space<vmem>>, vector<1x1x32x32xbf16>
    %41 = vector.shape_cast %40 : vector<1x1x32x32xbf16> to vector<32x32xbf16>
    %cst_37 = arith.constant dense<0.000000e+00> : vector<96x32xf32>
    %42 = tpu.matmul %39, %41, %cst_37 {dimension_numbers = #tpu.dot_dimension_numbers<[1], [0], [0], [1], [0, 0, 1, 1], [], []>} : vector<96x32xbf16>, vector<32x32xbf16>, vector<96x32xf32> -> vector<96x32xf32>
    %43 = arith.addf %38, %42 : vector<96x32xf32>
    %44 = vector.extract_strided_slice %4 {offsets = [50, 0], sizes = [96, 32], strides = [1, 1]} : vector<168x32xbf16> to vector<96x32xbf16>
    %c2_38 = arith.constant 2 : index
    %c2_39 = arith.constant 2 : index
    %c0_40 = arith.constant 0 : index
    %c0_41 = arith.constant 0 : index
    %45 = vector.load %arg3[%c2_38, %c2_39, %c0_40, %c0_41] : memref<3x3x32x32xbf16, #tpu.memory_space<vmem>>, vector<1x1x32x32xbf16>
    %46 = vector.shape_cast %45 : vector<1x1x32x32xbf16> to vector<32x32xbf16>
    %cst_42 = arith.constant dense<0.000000e+00> : vector<96x32xf32>
    %47 = tpu.matmul %44, %46, %cst_42 {dimension_numbers = #tpu.dot_dimension_numbers<[1], [0], [0], [1], [0, 0, 1, 1], [], []>} : vector<96x32xbf16>, vector<32x32xbf16>, vector<96x32xf32> -> vector<96x32xf32>
    %48 = arith.addf %43, %47 : vector<96x32xf32>
    %c0_43 = arith.constant 0 : index
    %c0_44 = arith.constant 0 : index
    %49 = vector.load %arg4[%c0_43, %c0_44] : memref<1x32xf32, #tpu.memory_space<vmem>>, vector<1x32xf32>
    %50 = vector.broadcast %49 : vector<1x32xf32> to vector<96x32xf32>
    %51 = arith.addf %48, %50 : vector<96x32xf32>
    %cst_45 = arith.constant 0.000000e+00 : f32
    %52 = vector.broadcast %cst_45 : f32 to vector<96x32xf32>
    %53 = arith.cmpf oge, %51, %52 : vector<96x32xf32>
    %cst_46 = arith.constant 0.00999999977 : f32
    %54 = vector.broadcast %cst_46 : f32 to vector<96x32xf32>
    %55 = arith.mulf %54, %51 : vector<96x32xf32>
    %56 = arith.select %53, %51, %55 : vector<96x32xi1>, vector<96x32xf32>
    %57 = vector.shape_cast %56 : vector<96x32xf32> to vector<4x24x32xf32>
    %58 = vector.extract_strided_slice %57 {offsets = [0, 0, 0], sizes = [4, 16, 32], strides = [1, 1, 1]} : vector<4x24x32xf32> to vector<4x16x32xf32>
    %59 = arith.truncf %58 : vector<4x16x32xf32> to vector<4x16x32xbf16>
    %c0_47 = arith.constant 0 : index
    %c0_48 = arith.constant 0 : index
    %c0_49 = arith.constant 0 : index
    %c0_50 = arith.constant 0 : index
    %60 = vector.load %arg5[%c0_47, %c0_48, %c0_49, %c0_50] : memref<1x4x16x32xbf16, #tpu.memory_space<vmem>>, vector<1x4x16x32xbf16>
    %61 = vector.shape_cast %60 : vector<1x4x16x32xbf16> to vector<4x16x32xbf16>
    %62 = vector.shape_cast %59 : vector<4x16x32xbf16> to vector<1x4x16x32xbf16>
    tpu.vector_store %arg5[%c0_47, %c0_48, %c0_49, %c0_50], %62 {strides = array<i32>} : memref<1x4x16x32xbf16, #tpu.memory_space<vmem>>, vector<1x4x16x32xbf16>,
    return
  }
  func.func @transform_0(%arg0: i32, %arg1: i32) -> (i32, i32, i32) {
    %c0_i32 = arith.constant 0 : i32
    %c0_i32_0 = arith.constant 0 : i32
    %c0_i32_1 = arith.constant 0 : i32
    return %arg0, %c0_i32, %c0_i32_0 : i32, i32, i32
  }
  func.func @transform_1(%arg0: i32, %arg1: i32) -> (i32, i32, i32, i32) {
    %c0_i32 = arith.constant 0 : i32
    %c0_i32_0 = arith.constant 0 : i32
    %c0_i32_1 = arith.constant 0 : i32
    %c0_i32_2 = arith.constant 0 : i32
    %c0_i32_3 = arith.constant 0 : i32
    return %c0_i32, %c0_i32_0, %c0_i32_1, %c0_i32_2 : i32, i32, i32, i32
  }
  func.func @transform_2(%arg0: i32, %arg1: i32) -> (i32, i32) {
    %c0_i32 = arith.constant 0 : i32
    %c0_i32_0 = arith.constant 0 : i32
    %c0_i32_1 = arith.constant 0 : i32
    return %c0_i32, %c0_i32_0 : i32, i32
  }
  func.func @transform_3(%arg0: i32, %arg1: i32) -> (i32, i32, i32, i32) {
    %c0_i32 = arith.constant 0 : i32
    %c0_i32_0 = arith.constant 0 : i32
    %c0_i32_1 = arith.constant 0 : i32
    return %arg0, %arg1, %c0_i32, %c0_i32_0 : i32, i32, i32, i32
  }
}

</mosaic_0001>

<llo_original>
// kernel: tpu_custom_call.1
$region0: #{tpu_custom_call.1}
  #allocation0 [shape = 'u32[]', space=smem, size = 0x4, offset = 0x4, fixed_abs, tag = 'smem constant byte address 0x4 - core index']
  #allocation1 [shape = 'u32[72,128]{1,0:T(1,128)}', space=vmem, size = 0x9000, scoped, tag = 'internal scratch']
  %s0 = inlined_call_operand.vmem [shape: bf16[2,456,32], index: 0, kind: input, shape index: {}]
  %s1 = inlined_call_operand.vmem [shape: bf16[3,3,32,32], index: 1, kind: input, shape index: {}]
  %s2 = inlined_call_operand.vmem [shape: f32[1,32], index: 2, kind: input, shape index: {}]
  %s3 = inlined_call_operand.hbm [shape: bf16[2,16,16,32], index: 3, kind: output, shape index: {}]
  %s4 = sld [smem:[#allocation0]]
  $region45: #{tpu_custom_call.1} parent=0
    _
  %s6 = ssub.s32 1, %s4
  %s7 = scalar_select 0, %s6, %s4
  $region1: #{tpu_custom_call.1} parent=0
    #allocation2 [shape = 'u8[32768]{0}', space=vmem, size = 0x8000, scoped, tag = 'output window, operand 0']
    #allocation3 [shape = 's32[2]{0}', space=sflag, size = 0x8, scoped, tag = 'scoped memory for tpu_custom_call.1']
    %8 = vsyncpa [#allocation3], 0
    %s9 = scalar_lea.sflag [#allocation3], 1
    %10 = vsyncpa %s9, 0
    loop: start=0, step=1, limit=10
    $region2: #{tpu_custom_call.1} parent=1 // loop_pre_header
      _
    $region3: #{tpu_custom_call.1} parent=1 // loop_header
      %s12 = sphi 0, %s16
      %p13 = scmp.ge.s32.totalorder %s12, 10
      %s19 = sphi 0, %s31
      %s20 = sphi 0, %s27
      %s21 = sphi 0, %s19
      %s22 = sphi 0, %s20
      %s23 = sphi 0, %s21
      %s24 = sphi 0, %s22
      %s34 = sphi 0, %s36
      %s37 = sphi 0, %s34
      %s38 = sphi 0, %s37
      %s54 = sphi 0, %s38
      %s58 = sphi 0, %s58
      %s60 = sphi 0, %s58
      %s61 = sphi 0, %s60
      %s75 = sphi 0, %s61
      %s79 = sphi 0, %s79
      %s81 = sphi 0, %s79
      %s82 = sphi 0, %s81
      %s96 = sphi 0, %s82
      %s104 = sphi 0, %s106
      %s107 = sphi 0, %s104
      %s108 = sphi 0, %s107
      %s124 = sphi 0, %s108
    $region4: #{tpu_custom_call.1} parent=1 // loop_header_branch
      %15 = sbr.rel (%p13) target = $region8
    $region5: #{tpu_custom_call.1} parent=1 // loop_body
      %s17 = ssub.s32 %s12, 1
      %s18 = ssub.s32 %s12, 2
      %s25 = sadd.s32 1, %s20
      %p26 = scmp.ge.s32.totalorder %s25, 4
      %s27 = scalar_select %p26, 0, %s25
      %s28 = sadd.s32 1, %s19
      %s29 = scalar_select %p26, %s28, %s19
      %p30 = scmp.ge.s32.totalorder %s29, 2
      %s31 = scalar_select %p30, 0, %s29
      %s32 = ssub.s32 %s19, %s31
      %p33 = scmp.eq.s32.totalorder %s32, 0
      %s35 = sadd.s32 %s34, 1
      %s36 = scalar_select %p33, %s34, %s35
      %p39 = pneg %p33
      %p40 = scmp.eq.s32.totalorder %s12, 7
      %p41 = por %p39, %p40
      %p42 = scmp.ne.s32.totalorder %s34, %s37
      %p43 = scmp.eq.s32.totalorder %s12, 0
      %p44 = por %p42, %p43
      %p45 = scmp.ne.s32.totalorder %s34, %s37
      %p46 = scmp.eq.s32.totalorder %s17, 7
      %p47 = por %p45, %p46
      %p48 = scmp.ne.s32.totalorder %s37, %s38
      %p49 = scmp.eq.s32.totalorder %s17, 0
      %p50 = por %p48, %p49
      %p51 = scmp.ne.s32.totalorder %s37, %s38
      %p52 = scmp.eq.s32.totalorder %s18, 7
      %p53 = por %p51, %p52
      %p55 = scmp.ne.s32.totalorder %s38, %s54
      %p56 = scmp.eq.s32.totalorder %s18, 0
      %p57 = por %p55, %p56
      %s59 = sadd.s32 %s58, 1
      %p62 = scmp.eq.s32.totalorder %s12, 7
      %p63 = scmp.ne.s32.totalorder %s58, %s60
      %p64 = scmp.eq.s32.totalorder %s12, 0
      %p65 = por %p63, %p64
      %p66 = scmp.ne.s32.totalorder %s58, %s60
      %p67 = scmp.eq.s32.totalorder %s17, 7
      %p68 = por %p66, %p67
      %p69 = scmp.ne.s32.totalorder %s60, %s61
      %p70 = scmp.eq.s32.totalorder %s17, 0
      %p71 = por %p69, %p70
      %p72 = scmp.ne.s32.totalorder %s60, %s61
      %p73 = scmp.eq.s32.totalorder %s18, 7
      %p74 = por %p72, %p73
      %p76 = scmp.ne.s32.totalorder %s61, %s75
      %p77 = scmp.eq.s32.totalorder %s18, 0
      %p78 = por %p76, %p77
      %s80 = sadd.s32 %s79, 1
      %p83 = scmp.eq.s32.totalorder %s12, 7
      %p84 = scmp.ne.s32.totalorder %s79, %s81
      %p85 = scmp.eq.s32.totalorder %s12, 0
      %p86 = por %p84, %p85
      %p87 = scmp.ne.s32.totalorder %s79, %s81
      %p88 = scmp.eq.s32.totalorder %s17, 7
      %p89 = por %p87, %p88
      %p90 = scmp.ne.s32.totalorder %s81, %s82
      %p91 = scmp.eq.s32.totalorder %s17, 0
      %p92 = por %p90, %p91
      %p93 = scmp.ne.s32.totalorder %s81, %s82
      %p94 = scmp.eq.s32.totalorder %s18, 7
      %p95 = por %p93, %p94
      %p97 = scmp.ne.s32.totalorder %s82, %s96
      %p98 = scmp.eq.s32.totalorder %s18, 0
      %p99 = por %p97, %p98
      %s100 = ssub.s32 %s19, %s31
      %s101 = ssub.s32 %s20, %s27
      %s102 = sor.u32 %s100, %s101
      %p103 = scmp.eq.s32.totalorder %s102, 0
      %s105 = sadd.s32 %s104, 1
      %s106 = scalar_select %p103, %s104, %s105
      %p109 = pneg %p103
      %p110 = scmp.eq.s32.totalorder %s12, 7
      %p111 = por %p109, %p110
      %p112 = scmp.ne.s32.totalorder %s104, %s107
      %p113 = scmp.eq.s32.totalorder %s12, 0
      %p114 = por %p112, %p113
      %p115 = scmp.ne.s32.totalorder %s104, %s107
      %p116 = scmp.eq.s32.totalorder %s17, 7
      %p117 = por %p115, %p116
      %p118 = scmp.ne.s32.totalorder %s107, %s108
      %p119 = scmp.eq.s32.totalorder %s17, 0
      %p120 = por %p118, %p119
      %p121 = scmp.ne.s32.totalorder %s107, %s108
      %p122 = scmp.eq.s32.totalorder %s18, 7
      %p123 = por %p121, %p122
      %p125 = scmp.ne.s32.totalorder %s108, %s124
      %p126 = scmp.eq.s32.totalorder %s18, 0
      %p127 = por %p125, %p126
      %p128 = scmp.le.s32.totalorder 1, %s12
      %p129 = scmp.lt.s32.totalorder %s12, 9
      %p130 = pnand %p128, %p129
      %p131 = pneg %p130
      // Predicated region
      $region9: #{tpu_custom_call.1} parent=5 // pred_check
        _
      $region10: #{tpu_custom_call.1} parent=5 // pred_check_branch
        %133 = sbr.rel (%p130) target = $region12
      $region11: #{tpu_custom_call.1} parent=5 // pred_region
        %s134 = ssub.s32 %s12, 1
        // Predicated region
        $region13: #{tpu_custom_call.1} parent=11 // pred_check
          %p135 = pneg %p71
        $region14: #{tpu_custom_call.1} parent=11 // pred_check_branch
          %137 = sbr.rel (%p135) target = $region16
        $region15: #{tpu_custom_call.1} parent=11 // pred_region
          _
        $region16: #{tpu_custom_call.1} parent=11 // pred_fallthru
          _
        // Predicated region
        $region17: #{tpu_custom_call.1} parent=11 // pred_check
          %p138 = pneg %p92
        $region18: #{tpu_custom_call.1} parent=11 // pred_check_branch
          %140 = sbr.rel (%p138) target = $region20
        $region19: #{tpu_custom_call.1} parent=11 // pred_region
          _
        $region20: #{tpu_custom_call.1} parent=11 // pred_fallthru
          _
      $region12: #{tpu_custom_call.1} parent=5 // pred_fallthru
        _
      %p141 = scmp.lt.s32.totalorder %s12, 8
      // Predicated region
      $region21: #{tpu_custom_call.1} parent=5 // pred_check
        %p142 = pneg %p141
      $region22: #{tpu_custom_call.1} parent=5 // pred_check_branch
        %144 = sbr.rel (%p142) target = $region24
      $region23: #{tpu_custom_call.1} parent=5 // pred_region
        // Predicated region
        $region25: #{tpu_custom_call.1} parent=23 // pred_check
          %p145 = pneg %p44
        $region26: #{tpu_custom_call.1} parent=23 // pred_check_branch
          %147 = sbr.rel (%p145) target = $region28
        $region27: #{tpu_custom_call.1} parent=23 // pred_region
          %p148 = scmp.lt.s32.totalorder %s19, 1
          %s149 = scalar_select %p148, %s19, 1
          %s150 = smul.addr %s149, 57
          %s151 = smul.addr %s150, 4
          %s152 = scalar_lea.vmem %s0, %s151
        $region28: #{tpu_custom_call.1} parent=23 // pred_fallthru
          _
      $region24: #{tpu_custom_call.1} parent=5 // pred_fallthru
        _
      %p153 = scmp.le.s32.totalorder 1, %s12
      %p154 = scmp.lt.s32.totalorder %s12, 9
      %p155 = pnand %p153, %p154
      %p156 = pneg %p155
      // Predicated region
      $region29: #{tpu_custom_call.1} parent=5 // pred_check
        _
      $region30: #{tpu_custom_call.1} parent=5 // pred_check_branch
        %158 = sbr.rel (%p155) target = $region32
      $region31: #{tpu_custom_call.1} parent=5 // pred_region
        %s159 = ssub.s32 %s12, 1
        %p160 = scmp.lt.s32.totalorder %s21, 1
        %s161 = scalar_select %p160, %s21, 1
        %s162 = smul.addr %s161, 57
        %s163 = smul.addr %s162, 4
        %s164 = scalar_lea.vmem %s0, %s163
        %p165 = pneg %p50
        %p166 = pneg %p47
        %p167 = pneg %p71
        %p168 = pneg %p68
        %p169 = pneg %p92
        %p170 = pneg %p89
        %p171 = pneg %p120
        %p172 = pneg %p117
        %s173 = sand.u32 %s107, 1
        %s174 = scalar_lea.sflag [#allocation3], %s173
        %s175 = sand.u32 %s107, 1
        %s176 = smul.addr %s175, 32
        %s177 = scalar_lea.vmem [#allocation2], %s176
        %p178 = scmp.lt.s32.totalorder %s21, 1
        %s179 = scalar_select %p178, %s21, 1
        %s180 = smul.addr %s179, 57
        %s181 = smul.addr %s180, 4
        %s182 = scalar_lea.vmem %s0, %s181
        %s183 = smul.u32 4, %s22
        %s185 = smul.u32 %s22, 96
        %s186 = sshra.s32 %s185, 3
        %s187 = sand.u32 %s185, 7
        %s188 = smul.addr %s186, 4
        %s189 = scalar_lea.vmem %s182, %s188
        %v190 = vld [vmem:[%s189] sm:$0xf]
        %v191 = vld [vmem:[%s189 + $0x4] sm:$0xf]
        %v192 = vld [vmem:[%s189 + $0x8] sm:$0xf]
        %v193 = vld [vmem:[%s189 + $0xc] sm:$0xf]
        %v194 = vld [vmem:[%s189 + $0x10] sm:$0xf]
        %v195 = vld [vmem:[%s189 + $0x14] sm:$0xf]
        %v196 = vld [vmem:[%s189 + $0x18] sm:$0xf]
        %v197 = vld [vmem:[%s189 + $0x1c] sm:$0xf]
        %v198 = vld [vmem:[%s189 + $0x20] sm:$0xf]
        %v199 = vld [vmem:[%s189 + $0x24] sm:$0xf]
        %v200 = vld [vmem:[%s189 + $0x28] sm:$0xf]
        %v201 = vld [vmem:[%s189 + $0x2c] sm:$0xf]
        %v202 = vld [vmem:[%s189 + $0x30] sm:$0xf]
        %v203 = vld [vmem:[%s189 + $0x34] sm:$0xf]
        %v204 = vld [vmem:[%s189 + $0x38] sm:$0xf]
        %v205 = vld [vmem:[%s189 + $0x3c] sm:$0xf]
        %v206 = vld [vmem:[%s189 + $0x40] sm:$0xf]
        %v207 = vld [vmem:[%s189 + $0x44] sm:$0xf]
        %v208 = vld [vmem:[%s189 + $0x48] sm:$0xf]
        %v209 = vld [vmem:[%s1] sm:$0xf]
        %v210 = vld [vmem:[%s1 + $0x4] sm:$0xf]
        %v211 = vld [vmem:[%s1 + $0x8] sm:$0xf]
        %v212 = vld [vmem:[%s1 + $0xc] sm:$0xf]
        %s213 = scalar_lea.vmem %s1, 16
        %v214 = vld [vmem:[%s213] sm:$0xf]
        %v215 = vld [vmem:[%s213 + $0x4] sm:$0xf]
        %v216 = vld [vmem:[%s213 + $0x8] sm:$0xf]
        %v217 = vld [vmem:[%s213 + $0xc] sm:$0xf]
        %v231 = vunpack.c.l.b16 %v190
        %v232 = vunpack.c.l.b16 %v191
        %v233 = vunpack.c.l.b16 %v192
        %v234 = vunpack.c.l.b16 %v193
        %v235 = vunpack.c.l.b16 %v194
        %v236 = vunpack.c.l.b16 %v195
        %v237 = vunpack.c.l.b16 %v196
        %v238 = vunpack.c.l.b16 %v197
        %v239 = vunpack.c.l.b16 %v198
        %v240 = vunpack.c.l.b16 %v199
        %v241 = vunpack.c.l.b16 %v200
        %v242 = vunpack.c.l.b16 %v201
        %v243 = vunpack.c.l.b16 %v202
        %v244 = vpack.c.b16 %v232, %v231
        %v245 = vpack.c.b16 %v234, %v233
        %v246 = vpack.c.b16 %v236, %v235
        %v247 = vpack.c.b16 %v238, %v237
        %v248 = vpack.c.b16 %v240, %v239
        %v249 = vpack.c.b16 %v242, %v241
        %v250 = vpack.c.b16 %v243, %v243
        %vm251 = vsmask.f32 7424
        %v253 = vshrl.u32 %v244, 16
        %v255 = vshll.u32 %v244, 16
        %v257 = vrot.slane %v255, 1
        %v258 = vor.u32 %v253, %v257
        %v260 = vshll.u32 %v245, 16
        %v262 = vrot.slane %v260, 1
        %v263 = vsel %vm251, %v258, %v262
        %v264 = vshrl.u32 %v245, 16
        %v266 = vor.u32 %v264, %v262
        %v268 = vshll.u32 %v246, 16
        %v270 = vrot.slane %v268, 1
        %v271 = vsel %vm251, %v266, %v270
        %v272 = vshrl.u32 %v246, 16
        %v274 = vor.u32 %v272, %v270
        %v276 = vshll.u32 %v247, 16
        %v278 = vrot.slane %v276, 1
        %v279 = vsel %vm251, %v274, %v278
        %v280 = vshrl.u32 %v247, 16
        %v282 = vor.u32 %v280, %v278
        %v284 = vshll.u32 %v248, 16
        %v286 = vrot.slane %v284, 1
        %v287 = vsel %vm251, %v282, %v286
        %v288 = vshrl.u32 %v248, 16
        %v290 = vor.u32 %v288, %v286
        %v292 = vshll.u32 %v249, 16
        %v294 = vrot.slane %v292, 1
        %v295 = vsel %vm251, %v290, %v294
        %v296 = vshrl.u32 %v249, 16
        %v298 = vor.u32 %v296, %v294
        %v300 = vshll.u32 %v250, 16
        %v302 = vrot.slane %v300, 1
        %v303 = vsel %vm251, %v298, %v302
        %v308 = vunpack.c.l.b16 %v214
        %v309 = vunpack.c.l.b16 %v215
        %v310 = vunpack.c.l.b16 %v216
        %v311 = vunpack.c.l.b16 %v217
        %v312 = vpack.c.b16 %v309, %v308
        %v313 = vpack.c.b16 %v311, %v310
        %vm316 = vcmask 261120
        %v318 = vsel %vm316, %v263, 0
        %v321 = vsel %vm316, %v271, 0
        %v324 = vsel %vm316, %v279, 0
        %v327 = vsel %vm316, %v287, 0
        %v330 = vsel %vm316, %v295, 0
        %v333 = vsel %vm316, %v303, 0
        %335 = vmatpush.bf16.msra.mxu0 0
        %336 = vmatpush.bf16.msra.mxu0 0
        %337 = vmatpush.bf16.msra.mxu0 0
        %338 = vmatpush.bf16.msra.mxu0 0
        %339 = vmatpush.bf16.msra.mxu0 0
        %340 = vmatpush.bf16.msra.mxu0 0
        %341 = vmatpush.bf16.msra.mxu0 %v313
        %342 = vmatpush.bf16.msra.mxu0 %v312
        %343 = vmatmul.bf16.gmra.mxu0 %v318
        %v344 = vpop.f32.mrf.mxu0
        %v345 = vadd.f32 0.0, %v344
        %v346 = vpop.f32.mrf.mxu0
        %v347 = vadd.f32 0.0, %v346
        %348 = vmatmul.bf16.gmra.mxu0 %v321
        %v349 = vpop.f32.mrf.mxu0
        %v350 = vpop.f32.mrf.mxu0
        %v351 = vadd.f32 0.0, %v350
        %352 = vmatmul.bf16.gmra.mxu0 %v324
        %v353 = vpop.f32.mrf.mxu0
        %v354 = vadd.f32 0.0, %v353
        %v355 = vpop.f32.mrf.mxu0
        %356 = vmatmul.bf16.gmra.mxu0 %v327
        %v357 = vpop.f32.mrf.mxu0
        %v358 = vadd.f32 0.0, %v357
        %v359 = vpop.f32.mrf.mxu0
        %v360 = vadd.f32 0.0, %v359
        %361 = vmatmul.bf16.gmra.mxu0 %v330
        %v362 = vpop.f32.mrf.mxu0
        %v363 = vpop.f32.mrf.mxu0
        %v364 = vadd.f32 0.0, %v363
        %365 = vmatmul.bf16.gmra.mxu0 %v333
        %v366 = vpop.f32.mrf.mxu0
        %v367 = vadd.f32 0.0, %v366
        %v368 = vpop.f32.mrf.mxu0
        %369 = vdwg.mxu0
        %v374 = vunpack.c.l.b16 %v209
        %v375 = vunpack.c.l.b16 %v210
        %v376 = vunpack.c.l.b16 %v211
        %v377 = vunpack.c.l.b16 %v212
        %v378 = vpack.c.b16 %v375, %v374
        %v379 = vpack.c.b16 %v377, %v376
        %v382 = vsel %vm316, %v244, 0
        %v384 = vsel %vm316, %v245, 0
        %v386 = vsel %vm316, %v246, 0
        %v388 = vsel %vm316, %v247, 0
        %v390 = vsel %vm316, %v248, 0
        %v392 = vsel %vm316, %v249, 0
        %394 = vmatpush.bf16.msra.mxu0 0
        %395 = vmatpush.bf16.msra.mxu0 0
        %396 = vmatpush.bf16.msra.mxu0 0
        %397 = vmatpush.bf16.msra.mxu0 0
        %398 = vmatpush.bf16.msra.mxu0 0
        %399 = vmatpush.bf16.msra.mxu0 0
        %400 = vmatpush.bf16.msra.mxu0 %v379
        %401 = vmatpush.bf16.msra.mxu0 %v378
        %402 = vmatmul.bf16.gmra.mxu0 %v382
        %v403 = vpop.f32.mrf.mxu0
        %v404 = vadd.f32 %v345, %v403
        %v405 = vpop.f32.mrf.mxu0
        %v406 = vadd.f32 %v347, %v405
        %407 = vmatmul.bf16.gmra.mxu0 %v384
        %v408 = vpop.f32.mrf.mxu0
        %v409 = vpop.f32.mrf.mxu0
        %v410 = vadd.f32 %v351, %v409
        %411 = vmatmul.bf16.gmra.mxu0 %v386
        %v412 = vpop.f32.mrf.mxu0
        %v413 = vadd.f32 %v354, %v412
        %v414 = vpop.f32.mrf.mxu0
        %415 = vmatmul.bf16.gmra.mxu0 %v388
        %v416 = vpop.f32.mrf.mxu0
        %v417 = vadd.f32 %v358, %v416
        %v418 = vpop.f32.mrf.mxu0
        %v419 = vadd.f32 %v360, %v418
        %420 = vmatmul.bf16.gmra.mxu0 %v390
        %v421 = vpop.f32.mrf.mxu0
        %v422 = vpop.f32.mrf.mxu0
        %v423 = vadd.f32 %v364, %v422
        %424 = vmatmul.bf16.gmra.mxu0 %v392
        %v425 = vpop.f32.mrf.mxu0
        %v426 = vadd.f32 %v367, %v425
        %v427 = vpop.f32.mrf.mxu0
        %428 = vdwg.mxu0
        %s429 = scalar_lea.vmem %s1, 32
        %v430 = vld [vmem:[%s429] sm:$0xf]
        %v431 = vld [vmem:[%s429 + $0x4] sm:$0xf]
        %v432 = vld [vmem:[%s429 + $0x8] sm:$0xf]
        %v433 = vld [vmem:[%s429 + $0xc] sm:$0xf]
        %vm434 = vcmask 1046528
        %v435 = vrot.slane %v244, 1
        %v436 = vrot.slane %v245, 1
        %v437 = vsel %vm434, %v435, %v436
        %v438 = vrot.slane %v246, 1
        %v439 = vsel %vm434, %v436, %v438
        %v440 = vrot.slane %v247, 1
        %v441 = vsel %vm434, %v438, %v440
        %v442 = vrot.slane %v248, 1
        %v443 = vsel %vm434, %v440, %v442
        %v444 = vrot.slane %v249, 1
        %v445 = vsel %vm434, %v442, %v444
        %v446 = vrot.slane %v250, 1
        %v447 = vsel %vm434, %v444, %v446
        %v452 = vunpack.c.l.b16 %v430
        %v453 = vunpack.c.l.b16 %v431
        %v454 = vunpack.c.l.b16 %v432
        %v455 = vunpack.c.l.b16 %v433
        %v456 = vpack.c.b16 %v453, %v452
        %v457 = vpack.c.b16 %v455, %v454
        %v461 = vsel %vm316, %v437, 0
        %v464 = vsel %vm316, %v439, 0
        %v467 = vsel %vm316, %v441, 0
        %v470 = vsel %vm316, %v443, 0
        %v473 = vsel %vm316, %v445, 0
        %v476 = vsel %vm316, %v447, 0
        %478 = vmatpush.bf16.msra.mxu0 0
        %479 = vmatpush.bf16.msra.mxu0 0
        %480 = vmatpush.bf16.msra.mxu0 0
        %481 = vmatpush.bf16.msra.mxu0 0
        %482 = vmatpush.bf16.msra.mxu0 0
        %483 = vmatpush.bf16.msra.mxu0 0
        %484 = vmatpush.bf16.msra.mxu0 %v457
        %485 = vmatpush.bf16.msra.mxu0 %v456
        %486 = vmatmul.bf16.gmra.mxu0 %v461
        %v487 = vpop.f32.mrf.mxu0
        %v488 = vadd.f32 0.0, %v487
        %v489 = vpop.f32.mrf.mxu0
        %v490 = vadd.f32 0.0, %v489
        %491 = vmatmul.bf16.gmra.mxu0 %v464
        %v492 = vpop.f32.mrf.mxu0
        %v493 = vpop.f32.mrf.mxu0
        %v494 = vadd.f32 0.0, %v493
        %495 = vmatmul.bf16.gmra.mxu0 %v467
        %v496 = vpop.f32.mrf.mxu0
        %v497 = vadd.f32 0.0, %v496
        %v498 = vpop.f32.mrf.mxu0
        %499 = vmatmul.bf16.gmra.mxu0 %v470
        %v500 = vpop.f32.mrf.mxu0
        %v501 = vadd.f32 0.0, %v500
        %v502 = vpop.f32.mrf.mxu0
        %v503 = vadd.f32 0.0, %v502
        %504 = vmatmul.bf16.gmra.mxu0 %v473
        %v505 = vpop.f32.mrf.mxu0
        %v506 = vpop.f32.mrf.mxu0
        %v507 = vadd.f32 0.0, %v506
        %508 = vmatmul.bf16.gmra.mxu0 %v476
        %v509 = vpop.f32.mrf.mxu0
        %v510 = vadd.f32 0.0, %v509
        %v511 = vpop.f32.mrf.mxu0
        %512 = vdwg.mxu0
        %v513 = vadd.f32 %v404, %v488
        %v514 = vadd.f32 %v406, %v490
        %v515 = vadd.f32 %v410, %v494
        %v516 = vadd.f32 %v413, %v497
        %v517 = vadd.f32 %v417, %v501
        %v518 = vadd.f32 %v419, %v503
        %v519 = vadd.f32 %v423, %v507
        %v520 = vadd.f32 %v426, %v510
        %s521 = scalar_lea.vmem %s1, 48
        %v522 = vld [vmem:[%s521] sm:$0xf]
        %v523 = vld [vmem:[%s521 + $0x4] sm:$0xf]
        %v524 = vld [vmem:[%s521 + $0x8] sm:$0xf]
        %v525 = vld [vmem:[%s521 + $0xc] sm:$0xf]
        %v528 = vunpack.c.l.b16 %v203
        %v529 = vunpack.c.l.b16 %v204
        %v530 = vpack.c.b16 %v235, %v234
        %v531 = vpack.c.b16 %v237, %v236
        %v532 = vpack.c.b16 %v239, %v238
        %v533 = vpack.c.b16 %v241, %v240
        %v534 = vpack.c.b16 %v243, %v242
        %v535 = vpack.c.b16 %v529, %v528
        %v540 = vunpack.c.l.b16 %v522
        %v541 = vunpack.c.l.b16 %v523
        %v542 = vunpack.c.l.b16 %v524
        %v543 = vunpack.c.l.b16 %v525
        %v544 = vpack.c.b16 %v541, %v540
        %v545 = vpack.c.b16 %v543, %v542
        %v549 = vsel %vm316, %v530, 0
        %v552 = vsel %vm316, %v531, 0
        %v555 = vsel %vm316, %v532, 0
        %v558 = vsel %vm316, %v533, 0
        %v561 = vsel %vm316, %v534, 0
        %v564 = vsel %vm316, %v535, 0
        %566 = vmatpush.bf16.msra.mxu0 0
        %567 = vmatpush.bf16.msra.mxu0 0
        %568 = vmatpush.bf16.msra.mxu0 0
        %569 = vmatpush.bf16.msra.mxu0 0
        %570 = vmatpush.bf16.msra.mxu0 0
        %571 = vmatpush.bf16.msra.mxu0 0
        %572 = vmatpush.bf16.msra.mxu0 %v545
        %573 = vmatpush.bf16.msra.mxu0 %v544
        %574 = vmatmul.bf16.gmra.mxu0 %v549
        %v575 = vpop.f32.mrf.mxu0
        %v576 = vadd.f32 0.0, %v575
        %v577 = vpop.f32.mrf.mxu0
        %v578 = vadd.f32 0.0, %v577
        %579 = vmatmul.bf16.gmra.mxu0 %v552
        %v580 = vpop.f32.mrf.mxu0
        %v581 = vpop.f32.mrf.mxu0
        %v582 = vadd.f32 0.0, %v581
        %583 = vmatmul.bf16.gmra.mxu0 %v555
        %v584 = vpop.f32.mrf.mxu0
        %v585 = vadd.f32 0.0, %v584
        %v586 = vpop.f32.mrf.mxu0
        %587 = vmatmul.bf16.gmra.mxu0 %v558
        %v588 = vpop.f32.mrf.mxu0
        %v589 = vadd.f32 0.0, %v588
        %v590 = vpop.f32.mrf.mxu0
        %v591 = vadd.f32 0.0, %v590
        %592 = vmatmul.bf16.gmra.mxu0 %v561
        %v593 = vpop.f32.mrf.mxu0
        %v594 = vpop.f32.mrf.mxu0
        %v595 = vadd.f32 0.0, %v594
        %596 = vmatmul.bf16.gmra.mxu0 %v564
        %v597 = vpop.f32.mrf.mxu0
        %v598 = vadd.f32 0.0, %v597
        %v599 = vpop.f32.mrf.mxu0
        %600 = vdwg.mxu0
        %v601 = vadd.f32 %v513, %v576
        %v602 = vadd.f32 %v514, %v578
        %v603 = vadd.f32 %v515, %v582
        %v604 = vadd.f32 %v516, %v585
        %v605 = vadd.f32 %v517, %v589
        %v606 = vadd.f32 %v518, %v591
        %v607 = vadd.f32 %v519, %v595
        %v608 = vadd.f32 %v520, %v598
        %s609 = scalar_lea.vmem %s1, 64
        %v610 = vld [vmem:[%s609] sm:$0xf]
        %v611 = vld [vmem:[%s609 + $0x4] sm:$0xf]
        %v612 = vld [vmem:[%s609 + $0x8] sm:$0xf]
        %v613 = vld [vmem:[%s609 + $0xc] sm:$0xf]
        %v615 = vunpack.c.l.b16 %v205
        %v616 = vpack.c.b16 %v615, %v615
        %v617 = vshrl.u32 %v530, 16
        %v619 = vshll.u32 %v530, 16
        %v621 = vrot.slane %v619, 1
        %v622 = vor.u32 %v617, %v621
        %v623 = vshll.u32 %v531, 16
        %v625 = vrot.slane %v623, 1
        %v626 = vsel %vm251, %v622, %v625
        %v627 = vshrl.u32 %v531, 16
        %v629 = vor.u32 %v627, %v625
        %v630 = vshll.u32 %v532, 16
        %v632 = vrot.slane %v630, 1
        %v633 = vsel %vm251, %v629, %v632
        %v634 = vshrl.u32 %v532, 16
        %v636 = vor.u32 %v634, %v632
        %v637 = vshll.u32 %v533, 16
        %v639 = vrot.slane %v637, 1
        %v640 = vsel %vm251, %v636, %v639
        %v641 = vshrl.u32 %v533, 16
        %v643 = vor.u32 %v641, %v639
        %v644 = vshll.u32 %v534, 16
        %v646 = vrot.slane %v644, 1
        %v647 = vsel %vm251, %v643, %v646
        %v648 = vshrl.u32 %v534, 16
        %v650 = vor.u32 %v648, %v646
        %v651 = vshll.u32 %v535, 16
        %v653 = vrot.slane %v651, 1
        %v654 = vsel %vm251, %v650, %v653
        %v655 = vshrl.u32 %v535, 16
        %v657 = vor.u32 %v655, %v653
        %v659 = vshll.u32 %v616, 16
        %v661 = vrot.slane %v659, 1
        %v662 = vsel %vm251, %v657, %v661
        %v667 = vunpack.c.l.b16 %v610
        %v668 = vunpack.c.l.b16 %v611
        %v669 = vunpack.c.l.b16 %v612
        %v670 = vunpack.c.l.b16 %v613
        %v671 = vpack.c.b16 %v668, %v667
        %v672 = vpack.c.b16 %v670, %v669
        %v676 = vsel %vm316, %v626, 0
        %v679 = vsel %vm316, %v633, 0
        %v682 = vsel %vm316, %v640, 0
        %v685 = vsel %vm316, %v647, 0
        %v688 = vsel %vm316, %v654, 0
        %v691 = vsel %vm316, %v662, 0
        %693 = vmatpush.bf16.msra.mxu0 0
        %694 = vmatpush.bf16.msra.mxu0 0
        %695 = vmatpush.bf16.msra.mxu0 0
        %696 = vmatpush.bf16.msra.mxu0 0
        %697 = vmatpush.bf16.msra.mxu0 0
        %698 = vmatpush.bf16.msra.mxu0 0
        %699 = vmatpush.bf16.msra.mxu0 %v672
        %700 = vmatpush.bf16.msra.mxu0 %v671
        %701 = vmatmul.bf16.gmra.mxu0 %v676
        %v702 = vpop.f32.mrf.mxu0
        %v703 = vadd.f32 0.0, %v702
        %v704 = vpop.f32.mrf.mxu0
        %v705 = vadd.f32 0.0, %v704
        %706 = vmatmul.bf16.gmra.mxu0 %v679
        %v707 = vpop.f32.mrf.mxu0
        %v708 = vpop.f32.mrf.mxu0
        %v709 = vadd.f32 0.0, %v708
        %710 = vmatmul.bf16.gmra.mxu0 %v682
        %v711 = vpop.f32.mrf.mxu0
        %v712 = vadd.f32 0.0, %v711
        %v713 = vpop.f32.mrf.mxu0
        %714 = vmatmul.bf16.gmra.mxu0 %v685
        %v715 = vpop.f32.mrf.mxu0
        %v716 = vadd.f32 0.0, %v715
        %v717 = vpop.f32.mrf.mxu0
        %v718 = vadd.f32 0.0, %v717
        %719 = vmatmul.bf16.gmra.mxu0 %v688
        %v720 = vpop.f32.mrf.mxu0
        %v721 = vpop.f32.mrf.mxu0
        %v722 = vadd.f32 0.0, %v721
        %723 = vmatmul.bf16.gmra.mxu0 %v691
        %v724 = vpop.f32.mrf.mxu0
        %v725 = vadd.f32 0.0, %v724
        %v726 = vpop.f32.mrf.mxu0
        %727 = vdwg.mxu0
        %v728 = vadd.f32 %v601, %v703
        %v729 = vadd.f32 %v602, %v705
        %v730 = vadd.f32 %v603, %v709
        %v731 = vadd.f32 %v604, %v712
        %v732 = vadd.f32 %v605, %v716
        %v733 = vadd.f32 %v606, %v718
        %v734 = vadd.f32 %v607, %v722
        %v735 = vadd.f32 %v608, %v725
        %s736 = scalar_lea.vmem %s1, 80
        %v737 = vld [vmem:[%s736] sm:$0xf]
        %v738 = vld [vmem:[%s736 + $0x4] sm:$0xf]
        %v739 = vld [vmem:[%s736 + $0x8] sm:$0xf]
        %v740 = vld [vmem:[%s736 + $0xc] sm:$0xf]
        %v741 = vrot.slane %v530, 1
        %v742 = vrot.slane %v531, 1
        %v743 = vsel %vm434, %v741, %v742
        %v744 = vrot.slane %v532, 1
        %v745 = vsel %vm434, %v742, %v744
        %v746 = vrot.slane %v533, 1
        %v747 = vsel %vm434, %v744, %v746
        %v748 = vrot.slane %v534, 1
        %v749 = vsel %vm434, %v746, %v748
        %v750 = vrot.slane %v535, 1
        %v751 = vsel %vm434, %v748, %v750
        %v752 = vrot.slane %v616, 1
        %v753 = vsel %vm434, %v750, %v752
        %v758 = vunpack.c.l.b16 %v737
        %v759 = vunpack.c.l.b16 %v738
        %v760 = vunpack.c.l.b16 %v739
        %v761 = vunpack.c.l.b16 %v740
        %v762 = vpack.c.b16 %v759, %v758
        %v763 = vpack.c.b16 %v761, %v760
        %v767 = vsel %vm316, %v743, 0
        %v770 = vsel %vm316, %v745, 0
        %v773 = vsel %vm316, %v747, 0
        %v776 = vsel %vm316, %v749, 0
        %v779 = vsel %vm316, %v751, 0
        %v782 = vsel %vm316, %v753, 0
        %784 = vmatpush.bf16.msra.mxu0 0
        %785 = vmatpush.bf16.msra.mxu0 0
        %786 = vmatpush.bf16.msra.mxu0 0
        %787 = vmatpush.bf16.msra.mxu0 0
        %788 = vmatpush.bf16.msra.mxu0 0
        %789 = vmatpush.bf16.msra.mxu0 0
        %790 = vmatpush.bf16.msra.mxu0 %v763
        %791 = vmatpush.bf16.msra.mxu0 %v762
        %792 = vmatmul.bf16.gmra.mxu0 %v767
        %v793 = vpop.f32.mrf.mxu0
        %v794 = vadd.f32 0.0, %v793
        %v795 = vpop.f32.mrf.mxu0
        %v796 = vadd.f32 0.0, %v795
        %797 = vmatmul.bf16.gmra.mxu0 %v770
        %v798 = vpop.f32.mrf.mxu0
        %v799 = vpop.f32.mrf.mxu0
        %v800 = vadd.f32 0.0, %v799
        %801 = vmatmul.bf16.gmra.mxu0 %v773
        %v802 = vpop.f32.mrf.mxu0
        %v803 = vadd.f32 0.0, %v802
        %v804 = vpop.f32.mrf.mxu0
        %805 = vmatmul.bf16.gmra.mxu0 %v776
        %v806 = vpop.f32.mrf.mxu0
        %v807 = vadd.f32 0.0, %v806
        %v808 = vpop.f32.mrf.mxu0
        %v809 = vadd.f32 0.0, %v808
        %810 = vmatmul.bf16.gmra.mxu0 %v779
        %v811 = vpop.f32.mrf.mxu0
        %v812 = vpop.f32.mrf.mxu0
        %v813 = vadd.f32 0.0, %v812
        %814 = vmatmul.bf16.gmra.mxu0 %v782
        %v815 = vpop.f32.mrf.mxu0
        %v816 = vadd.f32 0.0, %v815
        %v817 = vpop.f32.mrf.mxu0
        %818 = vdwg.mxu0
        %v819 = vadd.f32 %v728, %v794
        %v820 = vadd.f32 %v729, %v796
        %v821 = vadd.f32 %v730, %v800
        %v822 = vadd.f32 %v731, %v803
        %v823 = vadd.f32 %v732, %v807
        %v824 = vadd.f32 %v733, %v809
        %v825 = vadd.f32 %v734, %v813
        %v826 = vadd.f32 %v735, %v816
        %s827 = scalar_lea.vmem %s1, 96
        %v828 = vld [vmem:[%s827] sm:$0xf]
        %v829 = vld [vmem:[%s827 + $0x4] sm:$0xf]
        %v830 = vld [vmem:[%s827 + $0x8] sm:$0xf]
        %v831 = vld [vmem:[%s827 + $0xc] sm:$0xf]
        %v834 = vunpack.c.l.b16 %v206
        %v835 = vunpack.c.l.b16 %v207
        %v836 = vpack.c.b16 %v528, %v243
        %v837 = vpack.c.b16 %v615, %v529
        %v838 = vpack.c.b16 %v835, %v834
        %v843 = vunpack.c.l.b16 %v828
        %v844 = vunpack.c.l.b16 %v829
        %v845 = vunpack.c.l.b16 %v830
        %v846 = vunpack.c.l.b16 %v831
        %v847 = vpack.c.b16 %v844, %v843
        %v848 = vpack.c.b16 %v846, %v845
        %v852 = vsel %vm316, %v836, 0
        %v855 = vsel %vm316, %v837, 0
        %v858 = vsel %vm316, %v838, 0
        %860 = vmatpush.bf16.msra.mxu0 0
        %861 = vmatpush.bf16.msra.mxu0 0
        %862 = vmatpush.bf16.msra.mxu0 0
        %863 = vmatpush.bf16.msra.mxu0 0
        %864 = vmatpush.bf16.msra.mxu0 0
        %865 = vmatpush.bf16.msra.mxu0 0
        %866 = vmatpush.bf16.msra.mxu0 %v848
        %867 = vmatpush.bf16.msra.mxu0 %v847
        %868 = vmatmul.bf16.gmra.mxu0 %v388
        %v869 = vpop.f32.mrf.mxu0
        %v870 = vadd.f32 0.0, %v869
        %v871 = vpop.f32.mrf.mxu0
        %v872 = vadd.f32 0.0, %v871
        %873 = vmatmul.bf16.gmra.mxu0 %v390
        %v874 = vpop.f32.mrf.mxu0
        %v875 = vpop.f32.mrf.mxu0
        %v876 = vadd.f32 0.0, %v875
        %877 = vmatmul.bf16.gmra.mxu0 %v392
        %v878 = vpop.f32.mrf.mxu0
        %v879 = vadd.f32 0.0, %v878
        %v880 = vpop.f32.mrf.mxu0
        %881 = vmatmul.bf16.gmra.mxu0 %v852
        %v882 = vpop.f32.mrf.mxu0
        %v883 = vadd.f32 0.0, %v882
        %v884 = vpop.f32.mrf.mxu0
        %v885 = vadd.f32 0.0, %v884
        %886 = vmatmul.bf16.gmra.mxu0 %v855
        %v887 = vpop.f32.mrf.mxu0
        %v888 = vpop.f32.mrf.mxu0
        %v889 = vadd.f32 0.0, %v888
        %890 = vmatmul.bf16.gmra.mxu0 %v858
        %v891 = vpop.f32.mrf.mxu0
        %v892 = vadd.f32 0.0, %v891
        %v893 = vpop.f32.mrf.mxu0
        %894 = vdwg.mxu0
        %v895 = vadd.f32 %v819, %v870
        %v896 = vadd.f32 %v820, %v872
        %v897 = vadd.f32 %v821, %v876
        %v898 = vadd.f32 %v822, %v879
        %v899 = vadd.f32 %v823, %v883
        %v900 = vadd.f32 %v824, %v885
        %v901 = vadd.f32 %v825, %v889
        %v902 = vadd.f32 %v826, %v892
        %s903 = scalar_lea.vmem %s1, 112
        %v904 = vld [vmem:[%s903] sm:$0xf]
        %v905 = vld [vmem:[%s903 + $0x4] sm:$0xf]
        %v906 = vld [vmem:[%s903 + $0x8] sm:$0xf]
        %v907 = vld [vmem:[%s903 + $0xc] sm:$0xf]
        %v909 = vunpack.c.l.b16 %v208
        %v910 = vpack.c.b16 %v909, %v909
        %v911 = vshll.u32 %v836, 16
        %v913 = vrot.slane %v911, 1
        %v914 = vsel %vm251, %v298, %v913
        %v915 = vshrl.u32 %v836, 16
        %v917 = vor.u32 %v915, %v913
        %v918 = vshll.u32 %v837, 16
        %v920 = vrot.slane %v918, 1
        %v921 = vsel %vm251, %v917, %v920
        %v922 = vshrl.u32 %v837, 16
        %v924 = vor.u32 %v922, %v920
        %v925 = vshll.u32 %v838, 16
        %v927 = vrot.slane %v925, 1
        %v928 = vsel %vm251, %v924, %v927
        %v929 = vshrl.u32 %v838, 16
        %v931 = vor.u32 %v929, %v927
        %v933 = vshll.u32 %v910, 16
        %v935 = vrot.slane %v933, 1
        %v936 = vsel %vm251, %v931, %v935
        %v941 = vunpack.c.l.b16 %v904
        %v942 = vunpack.c.l.b16 %v905
        %v943 = vunpack.c.l.b16 %v906
        %v944 = vunpack.c.l.b16 %v907
        %v945 = vpack.c.b16 %v942, %v941
        %v946 = vpack.c.b16 %v944, %v943
        %v950 = vsel %vm316, %v914, 0
        %v953 = vsel %vm316, %v921, 0
        %v956 = vsel %vm316, %v928, 0
        %v959 = vsel %vm316, %v936, 0
        %961 = vmatpush.bf16.msra.mxu0 0
        %962 = vmatpush.bf16.msra.mxu0 0
        %963 = vmatpush.bf16.msra.mxu0 0
        %964 = vmatpush.bf16.msra.mxu0 0
        %965 = vmatpush.bf16.msra.mxu0 0
        %966 = vmatpush.bf16.msra.mxu0 0
        %967 = vmatpush.bf16.msra.mxu0 %v946
        %968 = vmatpush.bf16.msra.mxu0 %v945
        %969 = vmatmul.bf16.gmra.mxu0 %v327
        %v970 = vpop.f32.mrf.mxu0
        %v971 = vadd.f32 0.0, %v970
        %v972 = vpop.f32.mrf.mxu0
        %v973 = vadd.f32 0.0, %v972
        %974 = vmatmul.bf16.gmra.mxu0 %v330
        %v975 = vpop.f32.mrf.mxu0
        %v976 = vpop.f32.mrf.mxu0
        %v977 = vadd.f32 0.0, %v976
        %978 = vmatmul.bf16.gmra.mxu0 %v950
        %v979 = vpop.f32.mrf.mxu0
        %v980 = vadd.f32 0.0, %v979
        %v981 = vpop.f32.mrf.mxu0
        %982 = vmatmul.bf16.gmra.mxu0 %v953
        %v983 = vpop.f32.mrf.mxu0
        %v984 = vadd.f32 0.0, %v983
        %v985 = vpop.f32.mrf.mxu0
        %v986 = vadd.f32 0.0, %v985
        %987 = vmatmul.bf16.gmra.mxu0 %v956
        %v988 = vpop.f32.mrf.mxu0
        %v989 = vpop.f32.mrf.mxu0
        %v990 = vadd.f32 0.0, %v989
        %991 = vmatmul.bf16.gmra.mxu0 %v959
        %v992 = vpop.f32.mrf.mxu0
        %v993 = vadd.f32 0.0, %v992
        %v994 = vpop.f32.mrf.mxu0
        %995 = vdwg.mxu0
        %v996 = vadd.f32 %v895, %v971
        %v997 = vadd.f32 %v896, %v973
        %v998 = vadd.f32 %v897, %v977
        %v999 = vadd.f32 %v898, %v980
        %v1000 = vadd.f32 %v899, %v984
        %v1001 = vadd.f32 %v900, %v986
        %v1002 = vadd.f32 %v901, %v990
        %v1003 = vadd.f32 %v902, %v993
        %s1004 = scalar_lea.vmem %s1, 128
        %v1005 = vld [vmem:[%s1004] sm:$0xf]
        %v1006 = vld [vmem:[%s1004 + $0x4] sm:$0xf]
        %v1007 = vld [vmem:[%s1004 + $0x8] sm:$0xf]
        %v1008 = vld [vmem:[%s1004 + $0xc] sm:$0xf]
        %v1009 = vrot.slane %v836, 1
        %v1010 = vsel %vm434, %v444, %v1009
        %v1011 = vrot.slane %v837, 1
        %v1012 = vsel %vm434, %v1009, %v1011
        %v1013 = vrot.slane %v838, 1
        %v1014 = vsel %vm434, %v1011, %v1013
        %v1015 = vrot.slane %v910, 1
        %v1016 = vsel %vm434, %v1013, %v1015
        %v1021 = vunpack.c.l.b16 %v1005
        %v1022 = vunpack.c.l.b16 %v1006
        %v1023 = vunpack.c.l.b16 %v1007
        %v1024 = vunpack.c.l.b16 %v1008
        %v1025 = vpack.c.b16 %v1022, %v1021
        %v1026 = vpack.c.b16 %v1024, %v1023
        %v1030 = vsel %vm316, %v1010, 0
        %v1033 = vsel %vm316, %v1012, 0
        %v1036 = vsel %vm316, %v1014, 0
        %v1039 = vsel %vm316, %v1016, 0
        %1041 = vmatpush.bf16.msra.mxu0 0
        %1042 = vmatpush.bf16.msra.mxu0 0
        %1043 = vmatpush.bf16.msra.mxu0 0
        %1044 = vmatpush.bf16.msra.mxu0 0
        %1045 = vmatpush.bf16.msra.mxu0 0
        %1046 = vmatpush.bf16.msra.mxu0 0
        %1047 = vmatpush.bf16.msra.mxu0 %v1026
        %1048 = vmatpush.bf16.msra.mxu0 %v1025
        %1049 = vmatmul.bf16.gmra.mxu0 %v470
        %v1050 = vpop.f32.mrf.mxu0
        %v1051 = vadd.f32 0.0, %v1050
        %v1052 = vpop.f32.mrf.mxu0
        %v1053 = vadd.f32 0.0, %v1052
        %1054 = vmatmul.bf16.gmra.mxu0 %v473
        %v1055 = vpop.f32.mrf.mxu0
        %v1056 = vpop.f32.mrf.mxu0
        %v1057 = vadd.f32 0.0, %v1056
        %1058 = vmatmul.bf16.gmra.mxu0 %v1030
        %v1059 = vpop.f32.mrf.mxu0
        %v1060 = vadd.f32 0.0, %v1059
        %v1061 = vpop.f32.mrf.mxu0
        %1062 = vmatmul.bf16.gmra.mxu0 %v1033
        %v1063 = vpop.f32.mrf.mxu0
        %v1064 = vadd.f32 0.0, %v1063
        %v1065 = vpop.f32.mrf.mxu0
        %v1066 = vadd.f32 0.0, %v1065
        %1067 = vmatmul.bf16.gmra.mxu0 %v1036
        %v1068 = vpop.f32.mrf.mxu0
        %v1069 = vpop.f32.mrf.mxu0
        %v1070 = vadd.f32 0.0, %v1069
        %1071 = vmatmul.bf16.gmra.mxu0 %v1039
        %v1072 = vpop.f32.mrf.mxu0
        %v1073 = vadd.f32 0.0, %v1072
        %v1074 = vpop.f32.mrf.mxu0
        %1075 = vdwg.mxu0
        %v1076 = vadd.f32 %v996, %v1051
        %v1077 = vadd.f32 %v997, %v1053
        %v1078 = vadd.f32 %v998, %v1057
        %v1079 = vadd.f32 %v999, %v1060
        %v1080 = vadd.f32 %v1000, %v1064
        %v1081 = vadd.f32 %v1001, %v1066
        %v1082 = vadd.f32 %v1002, %v1070
        %v1083 = vadd.f32 %v1003, %v1073
        %v1084 = vld [vmem:[%s2] sm:$0x1]
        %v1086 = vperm.slane %v1084, 0
        %v1088 = vadd.f32 %v1076, %v1086
        %v1089 = vadd.f32 %v1077, %v1086
        %v1090 = vadd.f32 %v1078, %v1086
        %v1091 = vadd.f32 %v1079, %v1086
        %v1092 = vadd.f32 %v1080, %v1086
        %v1093 = vadd.f32 %v1081, %v1086
        %v1094 = vadd.f32 %v1082, %v1086
        %v1095 = vadd.f32 %v1083, %v1086
        %vm1096 = vcmp.ge.f32.partialorder %v1088, 0.0
        %vm1097 = vcmp.ge.f32.partialorder %v1089, 0.0
        %vm1098 = vcmp.ge.f32.partialorder %v1090, 0.0
        %vm1099 = vcmp.ge.f32.partialorder %v1091, 0.0
        %vm1100 = vcmp.ge.f32.partialorder %v1092, 0.0
        %vm1101 = vcmp.ge.f32.partialorder %v1093, 0.0
        %vm1102 = vcmp.ge.f32.partialorder %v1094, 0.0
        %vm1103 = vcmp.ge.f32.partialorder %v1095, 0.0
        %v1104 = vmul.f32 %v1088, 0.01
        %v1105 = vmul.f32 %v1089, 0.01
        %v1106 = vmul.f32 %v1090, 0.01
        %v1107 = vmul.f32 %v1091, 0.01
        %v1108 = vmul.f32 %v1092, 0.01
        %v1109 = vmul.f32 %v1093, 0.01
        %v1110 = vmul.f32 %v1094, 0.01
        %v1111 = vmul.f32 %v1095, 0.01
        %v1112 = vsel %vm1096, %v1088, %v1104
        %v1113 = vsel %vm1097, %v1089, %v1105
        %v1114 = vsel %vm1098, %v1090, %v1106
        %v1115 = vsel %vm1099, %v1091, %v1107
        %v1116 = vsel %vm1100, %v1092, %v1108
        %v1117 = vsel %vm1101, %v1093, %v1109
        %v1118 = vsel %vm1102, %v1094, %v1110
        %v1119 = vsel %vm1103, %v1095, %v1111
        %v1120 = vpack.c.bf16 %v1112, %v1112
        %v1121 = vpack.c.bf16 %v1113, %v1113
        %v1122 = vpack.c.bf16 %v1114, %v1114
        %v1123 = vpack.c.bf16 %v1115, %v1115
        %v1124 = vpack.c.bf16 %v1116, %v1116
        %v1125 = vpack.c.bf16 %v1117, %v1117
        %v1126 = vpack.c.bf16 %v1118, %v1118
        %v1127 = vpack.c.bf16 %v1119, %v1119
        %vm1128 = vcmask 257024
        %1129 = vst.msk [vmem:[%s177] sm:$0xf] %vm1128, %v1120
        %1130 = vst.msk [vmem:[%s177 + $0x4] sm:$0xf] %vm1128, %v1121
        %1131 = vst.msk [vmem:[%s177 + $0x8] sm:$0xf] %vm1128, %v1122
        %1132 = vst.msk [vmem:[%s177 + $0xc] sm:$0xf] %vm1128, %v1123
        %1133 = vst.msk [vmem:[%s177 + $0x10] sm:$0xf] %vm1128, %v1124
        %1134 = vst.msk [vmem:[%s177 + $0x14] sm:$0xf] %vm1128, %v1125
        %1135 = vst.msk [vmem:[%s177 + $0x18] sm:$0xf] %vm1128, %v1126
        %1136 = vst.msk [vmem:[%s177 + $0x1c] sm:$0xf] %vm1128, %v1127
        %s1137 = sand.u32 %s107, 1
        %s1138 = scalar_lea.sflag [#allocation3], %s1137
        %s1139 = sand.u32 %s107, 1
        %s1140 = smul.addr %s1139, 32
        %s1141 = scalar_lea.vmem [#allocation2], %s1140
        // Predicated region
        $region33: #{tpu_custom_call.1} parent=31 // pred_check
          %p1142 = pneg %p117
        $region34: #{tpu_custom_call.1} parent=31 // pred_check_branch
          %1144 = sbr.rel (%p1142) target = $region36
        $region35: #{tpu_custom_call.1} parent=31 // pred_region
          %s1145 = smul.u32 4, %s22
          %1147 = vsyncadd %s1138, 0
          %s1148 = smul.addr %s1145, 2
          %s1149 = smul.addr %s21, 32
          %s1150 = sadd.s32 %s1148, %s1149
          %s1151 = smul.addr %s1150, 4
          %s1152 = scalar_lea.hbm %s3, %s1151
          %s1153 = sshll.u32 %s1141, 4
          %s1154 = int_to_ptr.vmem [resolvable:$true] %s1153
          %s1155 = sshll.u32 %s1152, 4
          %s1156 = int_to_ptr.hbm [resolvable:$true] %s1155
          %1161 = dma.vmem_to_hbm [thread:$0]  %s1154, 512, %s1156, %s1138, 64, 64, 4
        $region36: #{tpu_custom_call.1} parent=31 // pred_fallthru
          _
      $region32: #{tpu_custom_call.1} parent=5 // pred_fallthru
        _
      %p1162 = scmp.le.s32.totalorder 2, %s12
      // Predicated region
      $region37: #{tpu_custom_call.1} parent=5 // pred_check
        %p1163 = pneg %p1162
      $region38: #{tpu_custom_call.1} parent=5 // pred_check_branch
        %1165 = sbr.rel (%p1163) target = $region40
      $region39: #{tpu_custom_call.1} parent=5 // pred_region
        %s1166 = ssub.s32 %s12, 2
        // Predicated region
        $region41: #{tpu_custom_call.1} parent=39 // pred_check
          %p1167 = pneg %p123
        $region42: #{tpu_custom_call.1} parent=39 // pred_check_branch
          %1169 = sbr.rel (%p1167) target = $region44
        $region43: #{tpu_custom_call.1} parent=39 // pred_region
          %s1170 = sand.u32 %s108, 1
          %s1171 = scalar_lea.sflag [#allocation3], %s1170
          %s1172 = sand.u32 %s108, 1
          %s1173 = smul.addr %s1172, 32
          %s1174 = scalar_lea.vmem [#allocation2], %s1173
          %1176 = dma.done %s1171, 512
        $region44: #{tpu_custom_call.1} parent=39 // pred_fallthru
          _
      $region40: #{tpu_custom_call.1} parent=5 // pred_fallthru
        _
    $region6: #{tpu_custom_call.1} parent=1 // loop_footer
      %s16 = sadd.s32 1, %s12
    $region7: #{tpu_custom_call.1} parent=1 // loop_footer_branch
      %11 = sbr.rel target = $region3
    $region8: #{tpu_custom_call.1} parent=1 // loop_exit
      _
    %1177 = vsyncpa [#allocation3], 1
    %s1178 = scalar_lea.sflag [#allocation3], 1
    %1179 = vsyncpa %s1178, 1

</llo_original>
